<compile_context>
chip_gen: v6e
topology: v6e:2x2x1
jax: 0.10.0
libtpu: 0.0.40
codegen_flags: <defaults>
</compile_context>

<pallas_src>
import jax
import jax.numpy as jnp
from jax.experimental import pallas as pl
from jax.experimental.pallas import tpu as pltpu

# Configurations.CRITIC_LAYERS stand-in (module-level constant in the repo)
CRITIC_LAYERS = (64, 64)


def _critic_kernel(s_ref, a_ref, w1_ref, b1_ref, w2_ref, b2_ref,
                   w3_ref, b3_ref, out_ref):
    l0 = w1_ref.shape[1]  # static = CRITIC_LAYERS[0] (64, sublane-aligned)

    # ---- FC1 + ReLU -------------------------------------------------------
    h1 = jnp.dot(s_ref[...], w1_ref[...], preferred_element_type=jnp.float32)
    h1 = jnp.maximum(h1 + b1_ref[...], 0.0)

    # ---- FC2 over concat([h1, actions]) -----------------------------------
    # concat([h1, a]) @ W2 == h1 @ W2[:l0] + a @ W2[l0:].  Static, aligned
    # slices of the VMEM-resident W2 block -> zero-cost views, no wrapper
    # slicing and one fewer input DMA descriptor.
    h2 = jnp.dot(h1, w2_ref[:l0, :], preferred_element_type=jnp.float32)
    h2 = h2 + jnp.dot(a_ref[...], w2_ref[l0:, :],
                      preferred_element_type=jnp.float32)
    h2 = jnp.maximum(h2 + b2_ref[...], 0.0)

    # ---- FC3 (output width 1) as VPU multiply + lane reduce ---------------
    # Avoids an N=1 MXU pass with a masked result pop; uses otherwise idle
    # VPU/XLU slots.  w3_ref is a (1, L1) row.
    out = jnp.sum(h2 * w3_ref[...], axis=-1, keepdims=True) + b3_ref[...]
    out_ref[...] = out.astype(out_ref.dtype)


def critic_forward(states, actions, params, *, batch_tile=256):
    """states: (B, S), actions: (B, A) -> (B, 1) float32."""
    w1, b1, w2, b2, w3, b3 = (params["w1"], params["b1"], params["w2"],
                              params["b2"], params["w3"], params["b3"])
    B, S = states.shape
    A = actions.shape[1]

    tile_b = min(B, batch_tile)
    grid = (pl.cdiv(B, tile_b),)

    batch_spec = lambda width: pl.BlockSpec((tile_b, width), lambda i: (i, 0))
    resident = lambda shp: pl.BlockSpec(shp, lambda i: (0, 0))  # VMEM-resident

    # NOTE: output stays (B, 1) to mirror the module's API.  For very large
    # batches a lane-dense (transposed) output layout avoids masked stores;
    # negligible at these sizes.
    return pl.pallas_call(
        _critic_kernel,
        out_shape=jax.ShapeDtypeStruct((B, 1), jnp.float32),
        grid=grid,
        in_specs=[
            batch_spec(S),        # states   (tile_b, S)
            batch_spec(A),        # actions  (tile_b, A)
            resident(w1.shape),   # W1       (S, L0)
            resident(b1.shape),   # b1       (1, L0)
            resident(w2.shape),   # W2       (L0 + A, L1)
            resident(b2.shape),   # b2       (1, L1)
            resident(w3.shape),   # W3       (1, L1)  torch nn.Linear layout
            resident(b3.shape),   # b3       (1, 1)
        ],
        out_specs=batch_spec(1),
        compiler_params=pltpu.CompilerParams(
            dimension_semantics=("parallel",)),
    )(states, actions, w1, b1, w2, b2, w3, b3)


def init_params(key, states_size, actions_size, low=-0.03, high=0.03):
    """Deterministic uniform(-0.03, 0.03) init, matching initialize_weights."""
    L0, L1 = CRITIC_LAYERS
    ks = jax.random.split(key, 6)
    u = lambda k, shp: jax.random.uniform(k, shp, jnp.float32, low, high)
    return {
        "w1": u(ks[0], (states_size, L0)),
        "b1": u(ks[1], (1, L0)),
        "w2": u(ks[2], (L0 + actions_size, L1)),
        "b2": u(ks[3], (1, L1)),
        "w3": u(ks[4], (1, L1)),   # == nn.Linear(L1, 1).weight layout
        "b3": u(ks[5], (1, 1)),
    }


def critic_reference(states, actions, params):
    h1 = jax.nn.relu(states @ params["w1"] + params["b1"])
    h1c = jnp.concatenate([h1, actions], axis=1)
    h2 = jax.nn.relu(h1c @ params["w2"] + params["b2"])
    return h2 @ params["w3"].T + params["b3"]


if __name__ == "__main__":
    B, states_size, actions_size, num_atoms = 8, 32, 8, 51  # num_atoms unused

    key = jax.random.PRNGKey(0)
    kp, ks, ka = jax.random.split(key, 3)
    params = init_params(kp, states_size, actions_size)
    states = jax.random.normal(ks, (B, states_size), jnp.float32)
    actions = jax.random.normal(ka, (B, actions_size), jnp.float32)

    out = critic_forward(states, actions, params)
    out = jax.block_until_ready(out)

    ref = critic_reference(states, actions, params)
    assert out.shape == (B, 1)
    assert jnp.allclose(out, ref, atol=1e-4, rtol=1e-4)

    print("KERNEL_OK")
</pallas_src>

<mosaic_0001>
module attributes {stable_mosaic.version = 11 : i64} {
  func.func @_critic_kernel(%arg0: i32, %arg1: memref<8x32xf32, #tpu.memory_space<vmem>>, %arg2: memref<8x8xf32, #tpu.memory_space<vmem>>, %arg3: memref<32x64xf32, #tpu.memory_space<vmem>>, %arg4: memref<1x64xf32, #tpu.memory_space<vmem>>, %arg5: memref<72x64xf32, #tpu.memory_space<vmem>>, %arg6: memref<1x64xf32, #tpu.memory_space<vmem>>, %arg7: memref<1x64xf32, #tpu.memory_space<vmem>>, %arg8: memref<1x1xf32, #tpu.memory_space<vmem>>, %arg9: memref<8x1xf32, #tpu.memory_space<vmem>>) attributes {dimension_semantics = [#tpu.dimension_semantics<parallel>], iteration_bounds = array<i64: 1>, scalar_prefetch = 0 : i64, scratch_operands = 0 : i64, tpu.core_type = #tpu.core_type<tc>, window_params = [{transform_indices = @transform_0, window_bounds = array<i64: 8, 32>}, {transform_indices = @transform_1, window_bounds = array<i64: 8, 8>}, {pipeline_mode = #tpu.pipeline_mode<synchronous>, transform_indices = @transform_2, window_bounds = array<i64: 32, 64>}, {pipeline_mode = #tpu.pipeline_mode<synchronous>, transform_indices = @transform_3, window_bounds = array<i64: 1, 64>}, {pipeline_mode = #tpu.pipeline_mode<synchronous>, transform_indices = @transform_4, window_bounds = array<i64: 72, 64>}, {pipeline_mode = #tpu.pipeline_mode<synchronous>, transform_indices = @transform_5, window_bounds = array<i64: 1, 64>}, {pipeline_mode = #tpu.pipeline_mode<synchronous>, transform_indices = @transform_6, window_bounds = array<i64: 1, 64>}, {pipeline_mode = #tpu.pipeline_mode<synchronous>, transform_indices = @transform_7, window_bounds = array<i64: 1, 1>}, {transform_indices = @transform_8, window_bounds = array<i64: 8, 1>}]} {
    %c0 = arith.constant 0 : index
    %c0_0 = arith.constant 0 : index
    %0 = vector.load %arg1[%c0, %c0_0] : memref<8x32xf32, #tpu.memory_space<vmem>>, vector<8x32xf32>
    %c0_1 = arith.constant 0 : index
    %c0_2 = arith.constant 0 : index
    %1 = vector.load %arg3[%c0_1, %c0_2] : memref<32x64xf32, #tpu.memory_space<vmem>>, vector<32x64xf32>
    %cst = arith.constant dense<0.000000e+00> : vector<8x64xf32>
    %2 = tpu.matmul %0, %1, %cst {dimension_numbers = #tpu.dot_dimension_numbers<[1], [0], [0], [1], [0, 0, 1, 1], [], []>} : vector<8x32xf32>, vector<32x64xf32>, vector<8x64xf32> -> vector<8x64xf32>
    %c0_3 = arith.constant 0 : index
    %c0_4 = arith.constant 0 : index
    %3 = vector.load %arg4[%c0_3, %c0_4] : memref<1x64xf32, #tpu.memory_space<vmem>>, vector<1x64xf32>
    %4 = vector.broadcast %3 : vector<1x64xf32> to vector<8x64xf32>
    %5 = arith.addf %2, %4 : vector<8x64xf32>
    %cst_5 = arith.constant 0.000000e+00 : f32
    %6 = vector.broadcast %cst_5 : f32 to vector<8x64xf32>
    %7 = arith.maximumf %5, %6 : vector<8x64xf32>
    %c0_6 = arith.constant 0 : index
    %c0_7 = arith.constant 0 : index
    %8 = vector.load %arg5[%c0_6, %c0_7] : memref<72x64xf32, #tpu.memory_space<vmem>>, vector<64x64xf32>
    %cst_8 = arith.constant dense<0.000000e+00> : vector<8x64xf32>
    %9 = tpu.matmul %7, %8, %cst_8 {dimension_numbers = #tpu.dot_dimension_numbers<[1], [0], [0], [1], [0, 0, 1, 1], [], []>} : vector<8x64xf32>, vector<64x64xf32>, vector<8x64xf32> -> vector<8x64xf32>
    %c0_9 = arith.constant 0 : index
    %c0_10 = arith.constant 0 : index
    %10 = vector.load %arg2[%c0_9, %c0_10] : memref<8x8xf32, #tpu.memory_space<vmem>>, vector<8x8xf32>
    %c64 = arith.constant 64 : index
    %c0_11 = arith.constant 0 : index
    %11 = vector.load %arg5[%c64, %c0_11] : memref<72x64xf32, #tpu.memory_space<vmem>>, vector<8x64xf32>
    %cst_12 = arith.constant dense<0.000000e+00> : vector<8x64xf32>
    %12 = tpu.matmul %10, %11, %cst_12 {dimension_numbers = #tpu.dot_dimension_numbers<[1], [0], [0], [1], [0, 0, 1, 1], [], []>} : vector<8x8xf32>, vector<8x64xf32>, vector<8x64xf32> -> vector<8x64xf32>
    %13 = arith.addf %9, %12 : vector<8x64xf32>
    %c0_13 = arith.constant 0 : index
    %c0_14 = arith.constant 0 : index
    %14 = vector.load %arg6[%c0_13, %c0_14] : memref<1x64xf32, #tpu.memory_space<vmem>>, vector<1x64xf32>
    %15 = vector.broadcast %14 : vector<1x64xf32> to vector<8x64xf32>
    %16 = arith.addf %13, %15 : vector<8x64xf32>
    %cst_15 = arith.constant 0.000000e+00 : f32
    %17 = vector.broadcast %cst_15 : f32 to vector<8x64xf32>
    %18 = arith.maximumf %16, %17 : vector<8x64xf32>
    %c0_16 = arith.constant 0 : index
    %c0_17 = arith.constant 0 : index
    %19 = vector.load %arg7[%c0_16, %c0_17] : memref<1x64xf32, #tpu.memory_space<vmem>>, vector<1x64xf32>
    %20 = vector.broadcast %19 : vector<1x64xf32> to vector<8x64xf32>
    %21 = arith.mulf %18, %20 : vector<8x64xf32>
    %cst_18 = arith.constant dense<0.000000e+00> : vector<8xf32>
    %22 = vector.multi_reduction <add>, %21, %cst_18 [1] : vector<8x64xf32> to vector<8xf32>
    %23 = vector.shape_cast %22 : vector<8xf32> to vector<8x1xf32>
    %c0_19 = arith.constant 0 : index
    %c0_20 = arith.constant 0 : index
    %24 = vector.load %arg8[%c0_19, %c0_20] : memref<1x1xf32, #tpu.memory_space<vmem>>, vector<1x1xf32>
    %25 = vector.broadcast %24 : vector<1x1xf32> to vector<8x1xf32>
    %26 = arith.addf %23, %25 : vector<8x1xf32>
    %c0_21 = arith.constant 0 : index
    %c0_22 = arith.constant 0 : index
    %27 = vector.load %arg9[%c0_21, %c0_22] : memref<8x1xf32, #tpu.memory_space<vmem>>, vector<8x1xf32>
    tpu.vector_store %arg9[%c0_21, %c0_22], %26 {strides = array<i32>} : memref<8x1xf32, #tpu.memory_space<vmem>>, vector<8x1xf32>,
    return
  }
  func.func @transform_0(%arg0: i32) -> (i32, i32) {
    %c0_i32 = arith.constant 0 : i32
    %c0_i32_0 = arith.constant 0 : i32
    return %arg0, %c0_i32 : i32, i32
  }
  func.func @transform_1(%arg0: i32) -> (i32, i32) {
    %c0_i32 = arith.constant 0 : i32
    %c0_i32_0 = arith.constant 0 : i32
    return %arg0, %c0_i32 : i32, i32
  }
  func.func @transform_2(%arg0: i32) -> (i32, i32) {
    %c0_i32 = arith.constant 0 : i32
    %c0_i32_0 = arith.constant 0 : i32
    %c0_i32_1 = arith.constant 0 : i32
    return %c0_i32, %c0_i32_0 : i32, i32
  }
  func.func @transform_3(%arg0: i32) -> (i32, i32) {
    %c0_i32 = arith.constant 0 : i32
    %c0_i32_0 = arith.constant 0 : i32
    %c0_i32_1 = arith.constant 0 : i32
    return %c0_i32, %c0_i32_0 : i32, i32
  }
  func.func @transform_4(%arg0: i32) -> (i32, i32) {
    %c0_i32 = arith.constant 0 : i32
    %c0_i32_0 = arith.constant 0 : i32
    %c0_i32_1 = arith.constant 0 : i32
    return %c0_i32, %c0_i32_0 : i32, i32
  }
  func.func @transform_5(%arg0: i32) -> (i32, i32) {
    %c0_i32 = arith.constant 0 : i32
    %c0_i32_0 = arith.constant 0 : i32
    %c0_i32_1 = arith.constant 0 : i32
    return %c0_i32, %c0_i32_0 : i32, i32
  }
  func.func @transform_6(%arg0: i32) -> (i32, i32) {
    %c0_i32 = arith.constant 0 : i32
    %c0_i32_0 = arith.constant 0 : i32
    %c0_i32_1 = arith.constant 0 : i32
    return %c0_i32, %c0_i32_0 : i32, i32
  }
  func.func @transform_7(%arg0: i32) -> (i32, i32) {
    %c0_i32 = arith.constant 0 : i32
    %c0_i32_0 = arith.constant 0 : i32
    %c0_i32_1 = arith.constant 0 : i32
    return %c0_i32, %c0_i32_0 : i32, i32
  }
  func.func @transform_8(%arg0: i32) -> (i32, i32) {
    %c0_i32 = arith.constant 0 : i32
    %c0_i32_0 = arith.constant 0 : i32
    return %arg0, %c0_i32 : i32, i32
  }
}

</mosaic_0001>

<llo_original>
// kernel: tpu_custom_call.1
$region0: #{tpu_custom_call.1}
  #allocation0 [shape = 'u32[]', space=smem, size = 0x4, offset = 0x4, fixed_abs, tag = 'smem constant byte address 0x4 - core index']
  #allocation1 [shape = 'u32[144,128]{1,0:T(1,128)}', space=vmem, size = 0x12000, scoped, tag = 'internal scratch']
  #allocation2 [shape = 'f32[1,1]{1,0:T(1,128)S(1)}', space=vmem, size = 0x200, scoped, tag = 'scoped memory for tpu_custom_call.1']
  %s0 = inlined_call_operand.vmem [shape: f32[8,32], index: 0, kind: input, shape index: {}]
  %s1 = inlined_call_operand.vmem [shape: f32[8,8], index: 1, kind: input, shape index: {}]
  %s2 = inlined_call_operand.vmem [shape: f32[32,64], index: 2, kind: input, shape index: {}]
  %s3 = inlined_call_operand.vmem [shape: f32[1,64], index: 3, kind: input, shape index: {}]
  %s4 = inlined_call_operand.vmem [shape: f32[72,64], index: 4, kind: input, shape index: {}]
  %s5 = inlined_call_operand.vmem [shape: f32[1,64], index: 5, kind: input, shape index: {}]
  %s6 = inlined_call_operand.vmem [shape: f32[1,64], index: 6, kind: input, shape index: {}]
  %s7 = inlined_call_operand.<no memory space> [shape: f32[1,1], index: 7, kind: input, shape index: {}]
  %s8 = inlined_call_operand.vmem [shape: f32[8,1], index: 8, kind: output, shape index: {}]
  %s9 = sld [smem:[#allocation0]]
  $region42: #{tpu_custom_call.1} parent=0
    _
  %s11 = ssub.s32 1, %s9
  %s12 = scalar_select 0, %s11, %s9
  %v13 = vstv %s7
  %14 = vst [vmem:[#allocation2] sm:$0x1] %v13
  // Predicated region
  $region2: #{tpu_custom_call.1} parent=0 // pred_check
    _
  $region3: #{tpu_custom_call.1} parent=0 // pred_check_branch
    %16 = sbr.rel (0) target = $region5
  $region4: #{tpu_custom_call.1} parent=0 // pred_region
    _
  $region5: #{tpu_custom_call.1} parent=0 // pred_fallthru
    _
  // Predicated region
  $region6: #{tpu_custom_call.1} parent=0 // pred_check
    _
  $region7: #{tpu_custom_call.1} parent=0 // pred_check_branch
    %18 = sbr.rel (0) target = $region9
  $region8: #{tpu_custom_call.1} parent=0 // pred_region
    _
  $region9: #{tpu_custom_call.1} parent=0 // pred_fallthru
    _
  // Predicated region
  $region10: #{tpu_custom_call.1} parent=0 // pred_check
    _
  $region11: #{tpu_custom_call.1} parent=0 // pred_check_branch
    %20 = sbr.rel (0) target = $region13
  $region12: #{tpu_custom_call.1} parent=0 // pred_region
    _
  $region13: #{tpu_custom_call.1} parent=0 // pred_fallthru
    _
  // Predicated region
  $region14: #{tpu_custom_call.1} parent=0 // pred_check
    _
  $region15: #{tpu_custom_call.1} parent=0 // pred_check_branch
    %22 = sbr.rel (0) target = $region17
  $region16: #{tpu_custom_call.1} parent=0 // pred_region
    _
  $region17: #{tpu_custom_call.1} parent=0 // pred_fallthru
    _
  // Predicated region
  $region18: #{tpu_custom_call.1} parent=0 // pred_check
    _
  $region19: #{tpu_custom_call.1} parent=0 // pred_check_branch
    %24 = sbr.rel (0) target = $region21
  $region20: #{tpu_custom_call.1} parent=0 // pred_region
    _
  $region21: #{tpu_custom_call.1} parent=0 // pred_fallthru
    _
  // Predicated region
  $region22: #{tpu_custom_call.1} parent=0 // pred_check
    _
  $region23: #{tpu_custom_call.1} parent=0 // pred_check_branch
    %26 = sbr.rel (0) target = $region25
  $region24: #{tpu_custom_call.1} parent=0 // pred_region
    _
  $region25: #{tpu_custom_call.1} parent=0 // pred_fallthru
    _
  // Predicated region
  $region26: #{tpu_custom_call.1} parent=0 // pred_check
    _
  $region27: #{tpu_custom_call.1} parent=0 // pred_check_branch
    %28 = sbr.rel (0) target = $region29
  $region28: #{tpu_custom_call.1} parent=0 // pred_region
    _
  $region29: #{tpu_custom_call.1} parent=0 // pred_fallthru
    _
  // Predicated region
  $region30: #{tpu_custom_call.1} parent=0 // pred_check
    _
  $region31: #{tpu_custom_call.1} parent=0 // pred_check_branch
    %30 = sbr.rel (0) target = $region33
  $region32: #{tpu_custom_call.1} parent=0 // pred_region
    _
  $region33: #{tpu_custom_call.1} parent=0 // pred_fallthru
    _
  %v31 = vld [vmem:[%s0] sm:$0xff]
  %v32 = vld [vmem:[%s2] sm:$0xff]
  %v33 = vld [vmem:[%s2 + $0x8] sm:$0xff]
  %v34 = vld [vmem:[%s2 + $0x10] sm:$0xff]
  %v35 = vld [vmem:[%s2 + $0x18] sm:$0xff]
  %v36 = vld [vmem:[%s3] sm:$0x1]
  %v38 = vlaneseq
  %v39 = vshrl.u32 %v38, 7
  %v40 = vsub.s32 0, %v39
  %v41 = vrot.slane %v36, %v40
  %vm43 = vcmask 261120
  %v45 = vsel %vm43, %v31, 0
  %47 = vmatprep.subr.mxu0 0.0
  %48 = vmatpush1.msra.mxu0 0.0
  %49 = vmatprep.subr.mxu0 0.0
  %50 = vmatpush1.msra.mxu0 0.0
  %51 = vmatprep.subr.mxu0 0.0
  %52 = vmatpush1.msra.mxu0 0.0
  %53 = vmatprep.subr.mxu0 0.0
  %54 = vmatpush1.msra.mxu0 0.0
  %55 = vmatprep.subr.mxu0 0.0
  %56 = vmatpush1.msra.mxu0 0.0
  %57 = vmatprep.subr.mxu0 0.0
  %58 = vmatpush1.msra.mxu0 0.0
  %59 = vmatprep.subr.mxu0 0.0
  %60 = vmatpush1.msra.mxu0 0.0
  %61 = vmatprep.subr.mxu0 0.0
  %62 = vmatpush1.msra.mxu0 0.0
  %63 = vmatprep.subr.mxu0 0.0
  %64 = vmatpush1.msra.mxu0 0.0
  %65 = vmatprep.subr.mxu0 0.0
  %66 = vmatpush1.msra.mxu0 0.0
  %67 = vmatprep.subr.mxu0 0.0
  %68 = vmatpush1.msra.mxu0 0.0
  %69 = vmatprep.subr.mxu0 0.0
  %70 = vmatpush1.msra.mxu0 0.0
  %71 = vmatprep.subr.mxu0 0.0
  %72 = vmatpush1.msra.mxu0 %v35
  %73 = vmatprep.subr.mxu0 0.0
  %74 = vmatpush1.msra.mxu0 %v34
  %75 = vmatprep.subr.mxu0 0.0
  %76 = vmatpush1.msra.mxu0 %v33
  %77 = vmatprep.subr.mxu0 0.0
  %78 = vmatpush1.msra.mxu0 %v32
  %79 = vmatprep.subr.mxu0 0.0
  %80 = vmatpush2.msra.mxu0 0.0
  %81 = vmatprep.subr.mxu0 0.0
  %82 = vmatpush2.msra.mxu0 0.0
  %83 = vmatprep.subr.mxu0 0.0
  %84 = vmatpush2.msra.mxu0 0.0
  %85 = vmatprep.subr.mxu0 0.0
  %86 = vmatpush2.msra.mxu0 0.0
  %87 = vmatprep.subr.mxu0 0.0
  %88 = vmatpush2.msra.mxu0 0.0
  %89 = vmatprep.subr.mxu0 0.0
  %90 = vmatpush2.msra.mxu0 0.0
  %91 = vmatprep.subr.mxu0 0.0
  %92 = vmatpush2.msra.mxu0 0.0
  %93 = vmatprep.subr.mxu0 0.0
  %94 = vmatpush2.msra.mxu0 0.0
  %95 = vmatprep.subr.mxu0 0.0
  %96 = vmatpush2.msra.mxu0 0.0
  %97 = vmatprep.subr.mxu0 0.0
  %98 = vmatpush2.msra.mxu0 0.0
  %99 = vmatprep.subr.mxu0 0.0
  %100 = vmatpush2.msra.mxu0 0.0
  %101 = vmatprep.subr.mxu0 0.0
  %102 = vmatpush2.msra.mxu0 0.0
  %103 = vmatprep.subr.mxu0 0.0
  %104 = vmatpush2.msra.mxu0 0.0
  %105 = vmatprep.subr.mxu0 0.0
  %106 = vmatpush2.msra.mxu0 0.0
  %107 = vmatprep.subr.mxu0 0.0
  %108 = vmatpush2.msra.mxu0 0.0
  %109 = vmatprep.subr.mxu0 0.0
  %110 = vmatpush2.msra.mxu0 0.0
  %111 = vmatprep.mubr.f32.mxu0 0.0
  %112 = vmatmul.mubr.f32.gmra.mxu0 %v45
  %v113 = vpop.f32.mrf.mxu0
  %v114 = vadd.f32 %v41, %v113
  %v115 = vpop.f32.mrf.mxu0
  %116 = vdwg.mxu0
  %v117 = vmax.f32 %v114, 0.0
  %v118 = vld [vmem:[%s4] sm:$0xff]
  %v119 = vld [vmem:[%s4 + $0x8] sm:$0xff]
  %v120 = vld [vmem:[%s4 + $0x10] sm:$0xff]
  %v121 = vld [vmem:[%s4 + $0x18] sm:$0xff]
  %v122 = vld [vmem:[%s4 + $0x20] sm:$0xff]
  %v123 = vld [vmem:[%s4 + $0x28] sm:$0xff]
  %v124 = vld [vmem:[%s4 + $0x30] sm:$0xff]
  %v125 = vld [vmem:[%s4 + $0x38] sm:$0xff]
  %v126 = vld [vmem:[%s1] sm:$0xff]
  %v127 = vld [vmem:[%s4 + $0x40] sm:$0xff]
  %vm128 = vcmask 64512
  %v130 = vsel %vm128, %v126, 0
  %132 = vmatprep.subr.mxu0 0.0
  %133 = vmatpush1.msra.mxu0 0.0
  %134 = vmatprep.subr.mxu0 0.0
  %135 = vmatpush1.msra.mxu0 0.0
  %136 = vmatprep.subr.mxu0 0.0
  %137 = vmatpush1.msra.mxu0 0.0
  %138 = vmatprep.subr.mxu0 0.0
  %139 = vmatpush1.msra.mxu0 0.0
  %140 = vmatprep.subr.mxu0 0.0
  %141 = vmatpush1.msra.mxu0 0.0
  %142 = vmatprep.subr.mxu0 0.0
  %143 = vmatpush1.msra.mxu0 0.0
  %144 = vmatprep.subr.mxu0 0.0
  %145 = vmatpush1.msra.mxu0 0.0
  %146 = vmatprep.subr.mxu0 0.0
  %147 = vmatpush1.msra.mxu0 0.0
  %148 = vmatprep.subr.mxu0 0.0
  %149 = vmatpush1.msra.mxu0 0.0
  %150 = vmatprep.subr.mxu0 0.0
  %151 = vmatpush1.msra.mxu0 0.0
  %152 = vmatprep.subr.mxu0 0.0
  %153 = vmatpush1.msra.mxu0 0.0
  %154 = vmatprep.subr.mxu0 0.0
  %155 = vmatpush1.msra.mxu0 0.0
  %156 = vmatprep.subr.mxu0 0.0
  %157 = vmatpush1.msra.mxu0 0.0
  %158 = vmatprep.subr.mxu0 0.0
  %159 = vmatpush1.msra.mxu0 0.0
  %160 = vmatprep.subr.mxu0 0.0
  %161 = vmatpush1.msra.mxu0 0.0
  %162 = vmatprep.subr.mxu0 0.0
  %163 = vmatpush1.msra.mxu0 %v127
  %164 = vmatprep.subr.mxu0 0.0
  %165 = vmatpush2.msra.mxu0 0.0
  %166 = vmatprep.subr.mxu0 0.0
  %167 = vmatpush2.msra.mxu0 0.0
  %168 = vmatprep.subr.mxu0 0.0
  %169 = vmatpush2.msra.mxu0 0.0
  %170 = vmatprep.subr.mxu0 0.0
  %171 = vmatpush2.msra.mxu0 0.0
  %172 = vmatprep.subr.mxu0 0.0
  %173 = vmatpush2.msra.mxu0 0.0
  %174 = vmatprep.subr.mxu0 0.0
  %175 = vmatpush2.msra.mxu0 0.0
  %176 = vmatprep.subr.mxu0 0.0
  %177 = vmatpush2.msra.mxu0 0.0
  %178 = vmatprep.subr.mxu0 0.0
  %179 = vmatpush2.msra.mxu0 0.0
  %180 = vmatprep.subr.mxu0 0.0
  %181 = vmatpush2.msra.mxu0 0.0
  %182 = vmatprep.subr.mxu0 0.0
  %183 = vmatpush2.msra.mxu0 0.0
  %184 = vmatprep.subr.mxu0 0.0
  %185 = vmatpush2.msra.mxu0 0.0
  %186 = vmatprep.subr.mxu0 0.0
  %187 = vmatpush2.msra.mxu0 0.0
  %188 = vmatprep.subr.mxu0 0.0
  %189 = vmatpush2.msra.mxu0 0.0
  %190 = vmatprep.subr.mxu0 0.0
  %191 = vmatpush2.msra.mxu0 0.0
  %192 = vmatprep.subr.mxu0 0.0
  %193 = vmatpush2.msra.mxu0 0.0
  %194 = vmatprep.subr.mxu0 0.0
  %195 = vmatpush2.msra.mxu0 0.0
  %196 = vmatprep.mubr.f32.mxu0 0.0
  %197 = vmatmul.mubr.f32.gmra.mxu0 %v130
  %v198 = vpop.f32.mrf.mxu0
  %v199 = vadd.f32 0.0, %v198
  %v200 = vpop.f32.mrf.mxu0
  %201 = vdwg.mxu0
  %vm202 = vcmask 523264
  %v204 = vsel %vm202, %v117, 0
  %206 = vmatprep.subr.mxu0 0.0
  %207 = vmatpush1.msra.mxu0 0.0
  %208 = vmatprep.subr.mxu0 0.0
  %209 = vmatpush1.msra.mxu0 0.0
  %210 = vmatprep.subr.mxu0 0.0
  %211 = vmatpush1.msra.mxu0 0.0
  %212 = vmatprep.subr.mxu0 0.0
  %213 = vmatpush1.msra.mxu0 0.0
  %214 = vmatprep.subr.mxu0 0.0
  %215 = vmatpush1.msra.mxu0 0.0
  %216 = vmatprep.subr.mxu0 0.0
  %217 = vmatpush1.msra.mxu0 0.0
  %218 = vmatprep.subr.mxu0 0.0
  %219 = vmatpush1.msra.mxu0 0.0
  %220 = vmatprep.subr.mxu0 0.0
  %221 = vmatpush1.msra.mxu0 0.0
  %222 = vmatprep.subr.mxu0 0.0
  %223 = vmatpush1.msra.mxu0 %v125
  %224 = vmatprep.subr.mxu0 0.0
  %225 = vmatpush1.msra.mxu0 %v124
  %226 = vmatprep.subr.mxu0 0.0
  %227 = vmatpush1.msra.mxu0 %v123
  %228 = vmatprep.subr.mxu0 0.0
  %229 = vmatpush1.msra.mxu0 %v122
  %230 = vmatprep.subr.mxu0 0.0
  %231 = vmatpush1.msra.mxu0 %v121
  %232 = vmatprep.subr.mxu0 0.0
  %233 = vmatpush1.msra.mxu0 %v120
  %234 = vmatprep.subr.mxu0 0.0
  %235 = vmatpush1.msra.mxu0 %v119
  %236 = vmatprep.subr.mxu0 0.0
  %237 = vmatpush1.msra.mxu0 %v118
  %238 = vmatprep.subr.mxu0 0.0
  %239 = vmatpush2.msra.mxu0 0.0
  %240 = vmatprep.subr.mxu0 0.0
  %241 = vmatpush2.msra.mxu0 0.0
  %242 = vmatprep.subr.mxu0 0.0
  %243 = vmatpush2.msra.mxu0 0.0
  %244 = vmatprep.subr.mxu0 0.0
  %245 = vmatpush2.msra.mxu0 0.0
  %246 = vmatprep.subr.mxu0 0.0
  %247 = vmatpush2.msra.mxu0 0.0
  %248 = vmatprep.subr.mxu0 0.0
  %249 = vmatpush2.msra.mxu0 0.0
  %250 = vmatprep.subr.mxu0 0.0
  %251 = vmatpush2.msra.mxu0 0.0
  %252 = vmatprep.subr.mxu0 0.0
  %253 = vmatpush2.msra.mxu0 0.0
  %254 = vmatprep.subr.mxu0 0.0
  %255 = vmatpush2.msra.mxu0 0.0
  %256 = vmatprep.subr.mxu0 0.0
  %257 = vmatpush2.msra.mxu0 0.0
  %258 = vmatprep.subr.mxu0 0.0
  %259 = vmatpush2.msra.mxu0 0.0
  %260 = vmatprep.subr.mxu0 0.0
  %261 = vmatpush2.msra.mxu0 0.0
  %262 = vmatprep.subr.mxu0 0.0
  %263 = vmatpush2.msra.mxu0 0.0
  %264 = vmatprep.subr.mxu0 0.0
  %265 = vmatpush2.msra.mxu0 0.0
  %266 = vmatprep.subr.mxu0 0.0
  %267 = vmatpush2.msra.mxu0 0.0
  %268 = vmatprep.subr.mxu0 0.0
  %269 = vmatpush2.msra.mxu0 0.0
  %270 = vmatprep.mubr.f32.mxu0 0.0
  %271 = vmatmul.mubr.f32.gmra.mxu0 %v204
  %v272 = vpop.f32.mrf.mxu0
  %v273 = vadd.f32 %v199, %v272
  %v274 = vpop.f32.mrf.mxu0
  %275 = vdwg.mxu0
  %v276 = vld [vmem:[%s5] sm:$0x1]
  %v278 = vlaneseq
  %v279 = vshrl.u32 %v278, 7
  %v280 = vsub.s32 0, %v279
  %v281 = vrot.slane %v276, %v280
  %v283 = vadd.f32 %v273, %v281
  %v284 = vmax.f32 %v283, 0.0
  %v285 = vld [vmem:[%s6] sm:$0x1]
  %v287 = vlaneseq
  %v288 = vshrl.u32 %v287, 7
  %v289 = vsub.s32 0, %v288
  %v290 = vrot.slane %v285, %v289
  %v292 = vmul.f32 %v284, %v290
  %v293 = vsel %vm202, %v292, 0.0
  %294 = vadd.xlane.f32.xlu0 %v293
  %v295 = vpop.xlane.xlu0 %294
  %v296 = vld [vmem:[#allocation2] sm:$0x1]
  %v298 = vlaneseq
  %v299 = vshrl.u32 %v298, 7
  %v300 = vsub.s32 0, %v299
  %v301 = vrot.slane %v296, %v300
  %v303 = vadd.f32 %v295, %v301
  %vm304 = vcmask 7168
  %305 = vst.msk [vmem:[%s8] sm:$0xff] %vm304, %v303
  // Predicated region
  $region34: #{tpu_custom_call.1} parent=0 // pred_check
    _
  $region35: #{tpu_custom_call.1} parent=0 // pred_check_branch
    %307 = sbr.rel (0) target = $region37
  $region36: #{tpu_custom_call.1} parent=0 // pred_region
    _
  $region37: #{tpu_custom_call.1} parent=0 // pred_fallthru
    _
  // Predicated region
  $region38: #{tpu_custom_call.1} parent=0 // pred_check
    _
  $region39: #{tpu_custom_call.1} parent=0 // pred_check_branch
    %309 = sbr.rel (0) target = $region41
  $region40: #{tpu_custom_call.1} parent=0 // pred_region
    _
  $region41: #{tpu_custom_call.1} parent=0 // pred_fallthru
    _

</llo_original>
